<compile_context>
chip_gen: v5e
topology: v5e:2x2
jax: 0.10.0
libtpu: 0.0.40
codegen_flags: <defaults>
</compile_context>

<pallas_src>
import functools

import jax
import jax.numpy as jnp
from jax.experimental import pallas as pl
from jax.experimental.pallas import tpu as pltpu

B = 2       # batch
S = 8       # sequence length
D = 32      # model feature dim
H = 64      # hidden dim of the synthetic inner model
T_MAX = 16  # number of diffusion timesteps (embedding-table rows)

CFG_SCALE = 2.5


def _cfg_kernel(ts_ref, x_ref, cond_ref, table_ref, w1_ref, b1_ref, w2_ref,
                b2_ref, out_ref, *, s, batch, seq):
    """Fused CFG sampler (conditional + unconditional pass + blend).

    One grid step over the whole (flattened) problem.

      ts_ref    : SMEM [batch]          int32 timesteps (scalar prefetch)
      x_ref     : VMEM [batch*seq, D]   flattened input
      cond_ref  : VMEM [batch, H]       per-batch condition embedding
      table_ref : VMEM [T_MAX, H]       timestep-embedding table
      w1_ref    : VMEM [D, H]   b1_ref : [1, H]
      w2_ref    : VMEM [H, D]   b2_ref : [1, D]
      out_ref   : VMEM [batch*seq, D]
    """
    # Shared first-layer matmul over all batch*seq rows (single MXU pass,
    # f32 accumulation). Both the cond and uncond passes reuse it.
    base = jnp.dot(x_ref[...], w1_ref[...],
                   preferred_element_type=jnp.float32)               # [N, H]
    b1 = b1_ref[...]                                                 # [1, H]
    w2 = w2_ref[...]                                                 # [H, D]
    b2 = b2_ref[...]                                                 # [1, D]

    # Static (unrolled) loop over the batch: per-batch timestep/cond rows.
    for b in range(batch):
        # In-kernel timestep-embedding gather via the scalar-prefetched index,
        # with b1 folded into the [1,H] row (one small add instead of a
        # broadcast add over [S,H]).
        t_idx = ts_ref[b]
        tb = table_ref[pl.ds(t_idx, 1), :] + b1                      # [1, H]
        c = cond_ref[pl.ds(b, 1), :]                                 # [1, H]

        base_b = base[b * seq:(b + 1) * seq, :] + tb                 # [S, H]

        # CFG blend applied to the HIDDEN states (before W2): algebraically
        # identical to blending the outputs, since b2 blends to b2, but needs
        # only one second-layer projection instead of two.
        h = s * jax.nn.gelu(base_b + c) + (1.0 - s) * jax.nn.gelu(base_b)

        out_b = jnp.dot(h, w2, preferred_element_type=jnp.float32) + b2
        out_ref[pl.ds(b * seq, seq), :] = out_b.astype(out_ref.dtype)


def classifier_free_sample(x, timesteps, cond, params, cfg_scale):
    """x: [B,S,D] f32, timesteps: [B] i32, cond: [B,H] f32."""
    w1, b1, w2, b2, temb_table = params
    batch, seq, d = x.shape
    hidden = cond.shape[1]
    t_rows = temb_table.shape[0]
    n = batch * seq

    # Layout plumbing (plain JAX): flatten batch*seq so the kernel sees one
    # sublane-denser block and a single grid step.
    x2 = x.reshape(n, d)
    b1_2d = b1[None, :]
    b2_2d = b2[None, :]

    kernel = functools.partial(_cfg_kernel, s=float(cfg_scale),
                               batch=batch, seq=seq)

    out2 = pl.pallas_call(
        kernel,
        out_shape=jax.ShapeDtypeStruct((n, d), x.dtype),
        grid_spec=pltpu.PrefetchScalarGridSpec(
            num_scalar_prefetch=1,          # timesteps -> SMEM
            grid=(1,),                      # whole problem in one step
            in_specs=[
                pl.BlockSpec((n, d), lambda i, ts: (0, 0)),          # x (flat)
                pl.BlockSpec((batch, hidden), lambda i, ts: (0, 0)),  # cond
                pl.BlockSpec((t_rows, hidden), lambda i, ts: (0, 0)),  # table
                pl.BlockSpec((d, hidden), lambda i, ts: (0, 0)),      # w1
                pl.BlockSpec((1, hidden), lambda i, ts: (0, 0)),      # b1
                pl.BlockSpec((hidden, d), lambda i, ts: (0, 0)),      # w2
                pl.BlockSpec((1, d), lambda i, ts: (0, 0)),           # b2
            ],
            out_specs=pl.BlockSpec((n, d), lambda i, ts: (0, 0)),
        ),
        compiler_params=pltpu.CompilerParams(
            dimension_semantics=("arbitrary",)),
    )(timesteps.astype(jnp.int32), x2, cond, temb_table, w1, b1_2d, w2, b2_2d)

    return out2.reshape(batch, seq, d)


def _inner_model_ref(x, temb, cond, params):
    """Pure-JAX reference of the synthetic inner model."""
    w1, b1, w2, b2, _ = params
    h = x @ w1 + b1[None, None, :] + temb[:, None, :]
    if cond is not None:
        h = h + cond[:, None, :]
    h = jax.nn.gelu(h)
    return h @ w2 + b2[None, None, :]


if __name__ == "__main__":
    key = jax.random.PRNGKey(0)
    k_x, k_c, k_w1, k_w2, k_b1, k_b2, k_te = jax.random.split(key, 7)

    # Deterministic synthetic parameters for the inner model.
    w1 = jax.random.normal(k_w1, (D, H), jnp.float32) * 0.05
    b1 = jax.random.normal(k_b1, (H,), jnp.float32) * 0.01
    w2 = jax.random.normal(k_w2, (H, D), jnp.float32) * 0.05
    b2 = jax.random.normal(k_b2, (D,), jnp.float32) * 0.01
    temb_table = jax.random.normal(k_te, (T_MAX, H), jnp.float32) * 0.1
    params = (w1, b1, w2, b2, temb_table)

    # Inputs.
    x = jax.random.normal(k_x, (B, S, D), jnp.float32)
    timesteps = jnp.array([3, 11], dtype=jnp.int32)
    cond = jax.random.normal(k_c, (B, H), jnp.float32)

    out = classifier_free_sample(x, timesteps, cond, params, CFG_SCALE)
    out = jax.block_until_ready(out)

    # Reference: s * model(x, t, cond) + (1 - s) * model(x, t)
    temb = temb_table[timesteps]
    out_cond = _inner_model_ref(x, temb, cond, params)
    out_uncond = _inner_model_ref(x, temb, None, params)
    ref = CFG_SCALE * out_cond + (1.0 - CFG_SCALE) * out_uncond

    assert out.shape == (B, S, D)
    assert jnp.allclose(out, ref, atol=1e-4, rtol=1e-4), "mismatch vs reference"

    print("KERNEL_OK")
</pallas_src>

<mosaic_0001>
module attributes {stable_mosaic.version = 11 : i64} {
  func.func @_cfg_kernel(%arg0: i32, %arg1: memref<2xi32, #tpu.memory_space<smem>>, %arg2: memref<16x32xf32, #tpu.memory_space<vmem>>, %arg3: memref<2x64xf32, #tpu.memory_space<vmem>>, %arg4: memref<16x64xf32, #tpu.memory_space<vmem>>, %arg5: memref<32x64xf32, #tpu.memory_space<vmem>>, %arg6: memref<1x64xf32, #tpu.memory_space<vmem>>, %arg7: memref<64x32xf32, #tpu.memory_space<vmem>>, %arg8: memref<1x32xf32, #tpu.memory_space<vmem>>, %arg9: memref<16x32xf32, #tpu.memory_space<vmem>>) attributes {dimension_semantics = [#tpu.dimension_semantics<arbitrary>], iteration_bounds = array<i64: 1>, scalar_prefetch = 1 : i64, scratch_operands = 0 : i64, tpu.core_type = #tpu.core_type<tc>, window_params = [{pipeline_mode = #tpu.pipeline_mode<synchronous>, transform_indices = @transform_0, window_bounds = array<i64: 16, 32>}, {pipeline_mode = #tpu.pipeline_mode<synchronous>, transform_indices = @transform_1, window_bounds = array<i64: 2, 64>}, {pipeline_mode = #tpu.pipeline_mode<synchronous>, transform_indices = @transform_2, window_bounds = array<i64: 16, 64>}, {pipeline_mode = #tpu.pipeline_mode<synchronous>, transform_indices = @transform_3, window_bounds = array<i64: 32, 64>}, {pipeline_mode = #tpu.pipeline_mode<synchronous>, transform_indices = @transform_4, window_bounds = array<i64: 1, 64>}, {pipeline_mode = #tpu.pipeline_mode<synchronous>, transform_indices = @transform_5, window_bounds = array<i64: 64, 32>}, {pipeline_mode = #tpu.pipeline_mode<synchronous>, transform_indices = @transform_6, window_bounds = array<i64: 1, 32>}, {pipeline_mode = #tpu.pipeline_mode<synchronous>, transform_indices = @transform_7, window_bounds = array<i64: 16, 32>}]} {
    %c0 = arith.constant 0 : index
    %c0_0 = arith.constant 0 : index
    %0 = vector.load %arg2[%c0, %c0_0] : memref<16x32xf32, #tpu.memory_space<vmem>>, vector<16x32xf32>
    %c0_1 = arith.constant 0 : index
    %c0_2 = arith.constant 0 : index
    %1 = vector.load %arg5[%c0_1, %c0_2] : memref<32x64xf32, #tpu.memory_space<vmem>>, vector<32x64xf32>
    %cst = arith.constant dense<0.000000e+00> : vector<16x64xf32>
    %2 = tpu.matmul %0, %1, %cst {dimension_numbers = #tpu.dot_dimension_numbers<[1], [0], [0], [1], [0, 0, 1, 1], [], []>} : vector<16x32xf32>, vector<32x64xf32>, vector<16x64xf32> -> vector<16x64xf32>
    %c0_3 = arith.constant 0 : index
    %c0_4 = arith.constant 0 : index
    %3 = vector.load %arg6[%c0_3, %c0_4] : memref<1x64xf32, #tpu.memory_space<vmem>>, vector<1x64xf32>
    %c0_5 = arith.constant 0 : index
    %c0_6 = arith.constant 0 : index
    %4 = vector.load %arg7[%c0_5, %c0_6] : memref<64x32xf32, #tpu.memory_space<vmem>>, vector<64x32xf32>
    %c0_7 = arith.constant 0 : index
    %c0_8 = arith.constant 0 : index
    %5 = vector.load %arg8[%c0_7, %c0_8] : memref<1x32xf32, #tpu.memory_space<vmem>>, vector<1x32xf32>
    %c0_9 = arith.constant 0 : index
    %6 = memref.load %arg1[%c0_9] : memref<2xi32, #tpu.memory_space<smem>>
    %7 = arith.index_cast %6 : i32 to index
    %c0_10 = arith.constant 0 : index
    %8 = vector.load %arg4[%7, %c0_10] : memref<16x64xf32, #tpu.memory_space<vmem>>, vector<1x64xf32>
    %9 = arith.addf %8, %3 : vector<1x64xf32>
    %c0_11 = arith.constant 0 : index
    %c0_12 = arith.constant 0 : index
    %10 = vector.load %arg3[%c0_11, %c0_12] : memref<2x64xf32, #tpu.memory_space<vmem>>, vector<1x64xf32>
    %11 = vector.extract_strided_slice %2 {offsets = [0, 0], sizes = [8, 64], strides = [1, 1]} : vector<16x64xf32> to vector<8x64xf32>
    %12 = vector.broadcast %9 : vector<1x64xf32> to vector<8x64xf32>
    %13 = arith.addf %11, %12 : vector<8x64xf32>
    %14 = vector.broadcast %10 : vector<1x64xf32> to vector<8x64xf32>
    %15 = arith.addf %13, %14 : vector<8x64xf32>
    %16 = arith.mulf %15, %15 : vector<8x64xf32>
    %17 = arith.mulf %15, %16 : vector<8x64xf32>
    %cst_13 = arith.constant 4.471500e-02 : f32
    %18 = vector.broadcast %cst_13 : f32 to vector<8x64xf32>
    %19 = arith.mulf %18, %17 : vector<8x64xf32>
    %20 = arith.addf %15, %19 : vector<8x64xf32>
    %cst_14 = arith.constant 0.797884583 : f32
    %21 = vector.broadcast %cst_14 : f32 to vector<8x64xf32>
    %22 = arith.mulf %21, %20 : vector<8x64xf32>
    %23 = math.tanh %22 : vector<8x64xf32>
    %cst_15 = arith.constant 1.000000e+00 : f32
    %24 = vector.broadcast %cst_15 : f32 to vector<8x64xf32>
    %25 = arith.addf %24, %23 : vector<8x64xf32>
    %cst_16 = arith.constant 5.000000e-01 : f32
    %26 = vector.broadcast %cst_16 : f32 to vector<8x64xf32>
    %27 = arith.mulf %26, %25 : vector<8x64xf32>
    %28 = arith.mulf %15, %27 : vector<8x64xf32>
    %cst_17 = arith.constant 2.500000e+00 : f32
    %29 = vector.broadcast %cst_17 : f32 to vector<8x64xf32>
    %30 = arith.mulf %29, %28 : vector<8x64xf32>
    %31 = arith.mulf %13, %13 : vector<8x64xf32>
    %32 = arith.mulf %13, %31 : vector<8x64xf32>
    %cst_18 = arith.constant 4.471500e-02 : f32
    %33 = vector.broadcast %cst_18 : f32 to vector<8x64xf32>
    %34 = arith.mulf %33, %32 : vector<8x64xf32>
    %35 = arith.addf %13, %34 : vector<8x64xf32>
    %cst_19 = arith.constant 0.797884583 : f32
    %36 = vector.broadcast %cst_19 : f32 to vector<8x64xf32>
    %37 = arith.mulf %36, %35 : vector<8x64xf32>
    %38 = math.tanh %37 : vector<8x64xf32>
    %cst_20 = arith.constant 1.000000e+00 : f32
    %39 = vector.broadcast %cst_20 : f32 to vector<8x64xf32>
    %40 = arith.addf %39, %38 : vector<8x64xf32>
    %cst_21 = arith.constant 5.000000e-01 : f32
    %41 = vector.broadcast %cst_21 : f32 to vector<8x64xf32>
    %42 = arith.mulf %41, %40 : vector<8x64xf32>
    %43 = arith.mulf %13, %42 : vector<8x64xf32>
    %cst_22 = arith.constant -1.500000e+00 : f32
    %44 = vector.broadcast %cst_22 : f32 to vector<8x64xf32>
    %45 = arith.mulf %44, %43 : vector<8x64xf32>
    %46 = arith.addf %30, %45 : vector<8x64xf32>
    %cst_23 = arith.constant dense<0.000000e+00> : vector<8x32xf32>
    %47 = tpu.matmul %46, %4, %cst_23 {dimension_numbers = #tpu.dot_dimension_numbers<[1], [0], [0], [1], [0, 0, 1, 1], [], []>} : vector<8x64xf32>, vector<64x32xf32>, vector<8x32xf32> -> vector<8x32xf32>
    %48 = vector.broadcast %5 : vector<1x32xf32> to vector<8x32xf32>
    %49 = arith.addf %47, %48 : vector<8x32xf32>
    %c0_24 = arith.constant 0 : index
    %c0_25 = arith.constant 0 : index
    %50 = vector.load %arg9[%c0_24, %c0_25] : memref<16x32xf32, #tpu.memory_space<vmem>>, vector<8x32xf32>
    tpu.vector_store %arg9[%c0_24, %c0_25], %49 {strides = array<i32>} : memref<16x32xf32, #tpu.memory_space<vmem>>, vector<8x32xf32>,
    %c1 = arith.constant 1 : index
    %51 = memref.load %arg1[%c1] : memref<2xi32, #tpu.memory_space<smem>>
    %52 = arith.index_cast %51 : i32 to index
    %c0_26 = arith.constant 0 : index
    %53 = vector.load %arg4[%52, %c0_26] : memref<16x64xf32, #tpu.memory_space<vmem>>, vector<1x64xf32>
    %54 = arith.addf %53, %3 : vector<1x64xf32>
    %c1_27 = arith.constant 1 : index
    %c0_28 = arith.constant 0 : index
    %55 = vector.load %arg3[%c1_27, %c0_28] : memref<2x64xf32, #tpu.memory_space<vmem>>, vector<1x64xf32>
    %56 = vector.extract_strided_slice %2 {offsets = [8, 0], sizes = [8, 64], strides = [1, 1]} : vector<16x64xf32> to vector<8x64xf32>
    %57 = vector.broadcast %54 : vector<1x64xf32> to vector<8x64xf32>
    %58 = arith.addf %56, %57 : vector<8x64xf32>
    %59 = vector.broadcast %55 : vector<1x64xf32> to vector<8x64xf32>
    %60 = arith.addf %58, %59 : vector<8x64xf32>
    %61 = arith.mulf %60, %60 : vector<8x64xf32>
    %62 = arith.mulf %60, %61 : vector<8x64xf32>
    %cst_29 = arith.constant 4.471500e-02 : f32
    %63 = vector.broadcast %cst_29 : f32 to vector<8x64xf32>
    %64 = arith.mulf %63, %62 : vector<8x64xf32>
    %65 = arith.addf %60, %64 : vector<8x64xf32>
    %cst_30 = arith.constant 0.797884583 : f32
    %66 = vector.broadcast %cst_30 : f32 to vector<8x64xf32>
    %67 = arith.mulf %66, %65 : vector<8x64xf32>
    %68 = math.tanh %67 : vector<8x64xf32>
    %cst_31 = arith.constant 1.000000e+00 : f32
    %69 = vector.broadcast %cst_31 : f32 to vector<8x64xf32>
    %70 = arith.addf %69, %68 : vector<8x64xf32>
    %cst_32 = arith.constant 5.000000e-01 : f32
    %71 = vector.broadcast %cst_32 : f32 to vector<8x64xf32>
    %72 = arith.mulf %71, %70 : vector<8x64xf32>
    %73 = arith.mulf %60, %72 : vector<8x64xf32>
    %cst_33 = arith.constant 2.500000e+00 : f32
    %74 = vector.broadcast %cst_33 : f32 to vector<8x64xf32>
    %75 = arith.mulf %74, %73 : vector<8x64xf32>
    %76 = arith.mulf %58, %58 : vector<8x64xf32>
    %77 = arith.mulf %58, %76 : vector<8x64xf32>
    %cst_34 = arith.constant 4.471500e-02 : f32
    %78 = vector.broadcast %cst_34 : f32 to vector<8x64xf32>
    %79 = arith.mulf %78, %77 : vector<8x64xf32>
    %80 = arith.addf %58, %79 : vector<8x64xf32>
    %cst_35 = arith.constant 0.797884583 : f32
    %81 = vector.broadcast %cst_35 : f32 to vector<8x64xf32>
    %82 = arith.mulf %81, %80 : vector<8x64xf32>
    %83 = math.tanh %82 : vector<8x64xf32>
    %cst_36 = arith.constant 1.000000e+00 : f32
    %84 = vector.broadcast %cst_36 : f32 to vector<8x64xf32>
    %85 = arith.addf %84, %83 : vector<8x64xf32>
    %cst_37 = arith.constant 5.000000e-01 : f32
    %86 = vector.broadcast %cst_37 : f32 to vector<8x64xf32>
    %87 = arith.mulf %86, %85 : vector<8x64xf32>
    %88 = arith.mulf %58, %87 : vector<8x64xf32>
    %cst_38 = arith.constant -1.500000e+00 : f32
    %89 = vector.broadcast %cst_38 : f32 to vector<8x64xf32>
    %90 = arith.mulf %89, %88 : vector<8x64xf32>
    %91 = arith.addf %75, %90 : vector<8x64xf32>
    %cst_39 = arith.constant dense<0.000000e+00> : vector<8x32xf32>
    %92 = tpu.matmul %91, %4, %cst_39 {dimension_numbers = #tpu.dot_dimension_numbers<[1], [0], [0], [1], [0, 0, 1, 1], [], []>} : vector<8x64xf32>, vector<64x32xf32>, vector<8x32xf32> -> vector<8x32xf32>
    %93 = vector.broadcast %5 : vector<1x32xf32> to vector<8x32xf32>
    %94 = arith.addf %92, %93 : vector<8x32xf32>
    %c8 = arith.constant 8 : index
    %c0_40 = arith.constant 0 : index
    %95 = vector.load %arg9[%c8, %c0_40] : memref<16x32xf32, #tpu.memory_space<vmem>>, vector<8x32xf32>
    tpu.vector_store %arg9[%c8, %c0_40], %94 {strides = array<i32>} : memref<16x32xf32, #tpu.memory_space<vmem>>, vector<8x32xf32>,
    return
  }
  func.func @transform_0(%arg0: i32, %arg1: memref<2xi32, #tpu.memory_space<smem>>) -> (i32, i32) {
    %c0_i32 = arith.constant 0 : i32
    %c0_i32_0 = arith.constant 0 : i32
    %c0_i32_1 = arith.constant 0 : i32
    return %c0_i32, %c0_i32_0 : i32, i32
  }
  func.func @transform_1(%arg0: i32, %arg1: memref<2xi32, #tpu.memory_space<smem>>) -> (i32, i32) {
    %c0_i32 = arith.constant 0 : i32
    %c0_i32_0 = arith.constant 0 : i32
    %c0_i32_1 = arith.constant 0 : i32
    return %c0_i32, %c0_i32_0 : i32, i32
  }
  func.func @transform_2(%arg0: i32, %arg1: memref<2xi32, #tpu.memory_space<smem>>) -> (i32, i32) {
    %c0_i32 = arith.constant 0 : i32
    %c0_i32_0 = arith.constant 0 : i32
    %c0_i32_1 = arith.constant 0 : i32
    return %c0_i32, %c0_i32_0 : i32, i32
  }
  func.func @transform_3(%arg0: i32, %arg1: memref<2xi32, #tpu.memory_space<smem>>) -> (i32, i32) {
    %c0_i32 = arith.constant 0 : i32
    %c0_i32_0 = arith.constant 0 : i32
    %c0_i32_1 = arith.constant 0 : i32
    return %c0_i32, %c0_i32_0 : i32, i32
  }
  func.func @transform_4(%arg0: i32, %arg1: memref<2xi32, #tpu.memory_space<smem>>) -> (i32, i32) {
    %c0_i32 = arith.constant 0 : i32
    %c0_i32_0 = arith.constant 0 : i32
    %c0_i32_1 = arith.constant 0 : i32
    return %c0_i32, %c0_i32_0 : i32, i32
  }
  func.func @transform_5(%arg0: i32, %arg1: memref<2xi32, #tpu.memory_space<smem>>) -> (i32, i32) {
    %c0_i32 = arith.constant 0 : i32
    %c0_i32_0 = arith.constant 0 : i32
    %c0_i32_1 = arith.constant 0 : i32
    return %c0_i32, %c0_i32_0 : i32, i32
  }
  func.func @transform_6(%arg0: i32, %arg1: memref<2xi32, #tpu.memory_space<smem>>) -> (i32, i32) {
    %c0_i32 = arith.constant 0 : i32
    %c0_i32_0 = arith.constant 0 : i32
    %c0_i32_1 = arith.constant 0 : i32
    return %c0_i32, %c0_i32_0 : i32, i32
  }
  func.func @transform_7(%arg0: i32, %arg1: memref<2xi32, #tpu.memory_space<smem>>) -> (i32, i32) {
    %c0_i32 = arith.constant 0 : i32
    %c0_i32_0 = arith.constant 0 : i32
    %c0_i32_1 = arith.constant 0 : i32
    return %c0_i32, %c0_i32_0 : i32, i32
  }
}

</mosaic_0001>

<llo_original>
// kernel: tpu_custom_call.1
$region0: #{tpu_custom_call.1}
  #allocation0 [shape = 'u32[]', space=smem, size = 0x4, offset = 0x4, fixed_abs, tag = 'smem constant byte address 0x4 - core index']
  #allocation1 [shape = 'u32[72,128]{1,0:T(1,128)}', space=vmem, size = 0x9000, scoped, tag = 'internal scratch']
  #allocation2 [shape = 's32[1]{0}', space=sflag, size = 0x4, scoped, tag = 'scoped memory for tpu_custom_call.1']
  #allocation3 [shape = 'u8[512]{0}', space=smem, size = 0x200, scoped, tag = 'prefetched SMEM operand 0']
  %s0 = inlined_call_operand.vmem [shape: s32[2], index: 0, kind: input, shape index: {}]
  %s1 = inlined_call_operand.vmem [shape: f32[16,32], index: 1, kind: input, shape index: {}]
  %s2 = inlined_call_operand.vmem [shape: f32[2,64], index: 2, kind: input, shape index: {}]
  %s3 = inlined_call_operand.vmem [shape: f32[16,64], index: 3, kind: input, shape index: {}]
  %s4 = inlined_call_operand.vmem [shape: f32[32,64], index: 4, kind: input, shape index: {}]
  %s5 = inlined_call_operand.vmem [shape: f32[1,64], index: 5, kind: input, shape index: {}]
  %s6 = inlined_call_operand.vmem [shape: f32[64,32], index: 6, kind: input, shape index: {}]
  %s7 = inlined_call_operand.vmem [shape: f32[1,32], index: 7, kind: input, shape index: {}]
  %s8 = inlined_call_operand.hbm [shape: f32[16,32], index: 8, kind: output, shape index: {}]
  %s9 = sld [smem:[#allocation0]]
  $region38: #{tpu_custom_call.1} parent=0
    _
  %s11 = ssub.s32 1, %s9
  %s12 = scalar_select 0, %s11, %s9
  %s14 = sshll.u32 %s0, 4
  %s15 = int_to_ptr.vmem [resolvable:$true] %s14
  %17 = dma.vmem_to_smem %s15, 16, [#allocation3], [#allocation2]
  %19 = dma.done [#allocation2], 16
  %20 = sfence
  $region1: #{tpu_custom_call.1} parent=0
    #allocation4 [shape = 'u8[8192]{0}', space=vmem, size = 0x2000, scoped, tag = 'output window, operand 0, single buffered']
    #allocation5 [shape = 's32[1]{0}', space=sflag, size = 0x4, scoped, tag = 'scoped memory for tpu_custom_call.1']
    %21 = vsyncpa [#allocation5], 0
    // Predicated region
    $region2: #{tpu_custom_call.1} parent=1 // pred_check
      _
    $region3: #{tpu_custom_call.1} parent=1 // pred_check_branch
      %23 = sbr.rel (0) target = $region5
    $region4: #{tpu_custom_call.1} parent=1 // pred_region
      _
    $region5: #{tpu_custom_call.1} parent=1 // pred_fallthru
      _
    // Predicated region
    $region6: #{tpu_custom_call.1} parent=1 // pred_check
      _
    $region7: #{tpu_custom_call.1} parent=1 // pred_check_branch
      %25 = sbr.rel (0) target = $region9
    $region8: #{tpu_custom_call.1} parent=1 // pred_region
      _
    $region9: #{tpu_custom_call.1} parent=1 // pred_fallthru
      _
    // Predicated region
    $region10: #{tpu_custom_call.1} parent=1 // pred_check
      _
    $region11: #{tpu_custom_call.1} parent=1 // pred_check_branch
      %27 = sbr.rel (0) target = $region13
    $region12: #{tpu_custom_call.1} parent=1 // pred_region
      _
    $region13: #{tpu_custom_call.1} parent=1 // pred_fallthru
      _
    // Predicated region
    $region14: #{tpu_custom_call.1} parent=1 // pred_check
      _
    $region15: #{tpu_custom_call.1} parent=1 // pred_check_branch
      %29 = sbr.rel (0) target = $region17
    $region16: #{tpu_custom_call.1} parent=1 // pred_region
      _
    $region17: #{tpu_custom_call.1} parent=1 // pred_fallthru
      _
    // Predicated region
    $region18: #{tpu_custom_call.1} parent=1 // pred_check
      _
    $region19: #{tpu_custom_call.1} parent=1 // pred_check_branch
      %31 = sbr.rel (0) target = $region21
    $region20: #{tpu_custom_call.1} parent=1 // pred_region
      _
    $region21: #{tpu_custom_call.1} parent=1 // pred_fallthru
      _
    // Predicated region
    $region22: #{tpu_custom_call.1} parent=1 // pred_check
      _
    $region23: #{tpu_custom_call.1} parent=1 // pred_check_branch
      %33 = sbr.rel (0) target = $region25
    $region24: #{tpu_custom_call.1} parent=1 // pred_region
      _
    $region25: #{tpu_custom_call.1} parent=1 // pred_fallthru
      _
    // Predicated region
    $region26: #{tpu_custom_call.1} parent=1 // pred_check
      _
    $region27: #{tpu_custom_call.1} parent=1 // pred_check_branch
      %35 = sbr.rel (0) target = $region29
    $region28: #{tpu_custom_call.1} parent=1 // pred_region
      _
    $region29: #{tpu_custom_call.1} parent=1 // pred_fallthru
      _
    %v36 = vld [vmem:[%s1] sm:$0xff]
    %v37 = vld [vmem:[%s1 + $0x8] sm:$0xff]
    %v38 = vld [vmem:[%s4] sm:$0xff]
    %v39 = vld [vmem:[%s4 + $0x8] sm:$0xff]
    %v40 = vld [vmem:[%s4 + $0x10] sm:$0xff]
    %v41 = vld [vmem:[%s4 + $0x18] sm:$0xff]
    %vm42 = vcmask 261120
    %v44 = vsel %vm42, %v36, 0
    %v47 = vsel %vm42, %v37, 0
    %49 = vmatpush.msra.mxu0 0.0
    %50 = vmatpush.msra.mxu0 0.0
    %51 = vmatpush.msra.mxu0 0.0
    %52 = vmatpush.msra.mxu0 0.0
    %53 = vmatpush.msra.mxu0 0.0
    %54 = vmatpush.msra.mxu0 0.0
    %55 = vmatpush.msra.mxu0 0.0
    %56 = vmatpush.msra.mxu0 0.0
    %57 = vmatpush.msra.mxu0 0.0
    %58 = vmatpush.msra.mxu0 0.0
    %59 = vmatpush.msra.mxu0 0.0
    %60 = vmatpush.msra.mxu0 0.0
    %61 = vmatpush.msra.mxu0 %v41
    %62 = vmatpush.msra.mxu0 %v40
    %63 = vmatpush.msra.mxu0 %v39
    %64 = vmatpush.msra.mxu0 %v38
    %65 = vmatmul.f32.gmra.mxu0 %v44
    %v66 = vpop.f32.mrf.mxu0
    %v67 = vadd.f32 0.0, %v66
    %68 = vmatmul.f32.gmra.mxu0 %v47
    %v69 = vpop.f32.mrf.mxu0
    %v70 = vadd.f32 0.0, %v69
    %71 = vdwg.mxu0
    %v72 = vld [vmem:[%s5] sm:$0x1]
    %v73 = vld [vmem:[%s6] sm:$0xff]
    %v74 = vld [vmem:[%s6 + $0x8] sm:$0xff]
    %v75 = vld [vmem:[%s6 + $0x10] sm:$0xff]
    %v76 = vld [vmem:[%s6 + $0x18] sm:$0xff]
    %v77 = vld [vmem:[%s6 + $0x20] sm:$0xff]
    %v78 = vld [vmem:[%s6 + $0x28] sm:$0xff]
    %v79 = vld [vmem:[%s6 + $0x30] sm:$0xff]
    %v80 = vld [vmem:[%s6 + $0x38] sm:$0xff]
    %v81 = vld [vmem:[%s7] sm:$0x1]
    %s82 = sld [smem:[#allocation3]]
    %s83 = scalar_lea.vmem %s3, %s82
    %v84 = vld [vmem:[%s83] sm:$0x1]
    %v85 = vadd.f32 %v84, %v72
    %v86 = vld [vmem:[%s2] sm:$0x1]
    %v87 = vperm.slane %v85, 0
    %v88 = vadd.f32 %v67, %v87
    %v89 = vperm.slane %v86, 0
    %v90 = vadd.f32 %v88, %v89
    %v91 = vmul.f32 %v90, %v90
    %v92 = vmul.f32 %v90, %v91
    %v93 = vmul.f32 %v92, 0.044715
    %v94 = vadd.f32 %v90, %v93
    %v95 = vmul.f32 %v94, 0.7978846
    %v96 = vtanh.pop %v95
    %v97 = vadd.f32 %v96, 1.0
    %v98 = vmul.f32 %v97, 0.5
    %v99 = vmul.f32 %v90, %v98
    %v100 = vmul.f32 %v99, 2.5
    %v101 = vmul.f32 %v88, %v88
    %v102 = vmul.f32 %v88, %v101
    %v103 = vmul.f32 %v102, 0.044715
    %v104 = vadd.f32 %v88, %v103
    %v105 = vmul.f32 %v104, 0.7978846
    %v106 = vtanh.pop %v105
    %v107 = vadd.f32 %v106, 1.0
    %v108 = vmul.f32 %v107, 0.5
    %v109 = vmul.f32 %v88, %v108
    %v110 = vmul.f32 %v109, -1.5
    %v111 = vadd.f32 %v100, %v110
    %v113 = vperm.slane %v81, 0
    %vm115 = vcmask 523264
    %v117 = vsel %vm115, %v111, 0
    %119 = vmatpush.msra.mxu0 0.0
    %120 = vmatpush.msra.mxu0 0.0
    %121 = vmatpush.msra.mxu0 0.0
    %122 = vmatpush.msra.mxu0 0.0
    %123 = vmatpush.msra.mxu0 0.0
    %124 = vmatpush.msra.mxu0 0.0
    %125 = vmatpush.msra.mxu0 0.0
    %126 = vmatpush.msra.mxu0 0.0
    %127 = vmatpush.msra.mxu0 %v80
    %128 = vmatpush.msra.mxu0 %v79
    %129 = vmatpush.msra.mxu0 %v78
    %130 = vmatpush.msra.mxu0 %v77
    %131 = vmatpush.msra.mxu0 %v76
    %132 = vmatpush.msra.mxu0 %v75
    %133 = vmatpush.msra.mxu0 %v74
    %134 = vmatpush.msra.mxu0 %v73
    %135 = vmatmul.f32.gmra.mxu0 %v117
    %v136 = vpop.f32.mrf.mxu0
    %v137 = vadd.f32 %v113, %v136
    %138 = vdwg.mxu0
    %139 = vst.msk [vmem:[#allocation4] sm:$0xff] %vm42, %v137
    %s140 = sld [smem:[#allocation3 + $0x1]]
    %s141 = scalar_lea.vmem %s3, %s140
    %v142 = vld [vmem:[%s141] sm:$0x1]
    %v143 = vadd.f32 %v142, %v72
    %v144 = vld [vmem:[%s2 + $0x1] sm:$0x1]
    %v145 = vperm.slane %v143, 0
    %v146 = vadd.f32 %v70, %v145
    %v147 = vperm.slane %v144, 0
    %v148 = vadd.f32 %v146, %v147
    %v149 = vmul.f32 %v148, %v148
    %v150 = vmul.f32 %v148, %v149
    %v151 = vmul.f32 %v150, 0.044715
    %v152 = vadd.f32 %v148, %v151
    %v153 = vmul.f32 %v152, 0.7978846
    %v154 = vtanh.pop %v153
    %v155 = vadd.f32 %v154, 1.0
    %v156 = vmul.f32 %v155, 0.5
    %v157 = vmul.f32 %v148, %v156
    %v158 = vmul.f32 %v157, 2.5
    %v159 = vmul.f32 %v146, %v146
    %v160 = vmul.f32 %v146, %v159
    %v161 = vmul.f32 %v160, 0.044715
    %v162 = vadd.f32 %v146, %v161
    %v163 = vmul.f32 %v162, 0.7978846
    %v164 = vtanh.pop %v163
    %v165 = vadd.f32 %v164, 1.0
    %v166 = vmul.f32 %v165, 0.5
    %v167 = vmul.f32 %v146, %v166
    %v168 = vmul.f32 %v167, -1.5
    %v169 = vadd.f32 %v158, %v168
    %v171 = vsel %vm115, %v169, 0
    %173 = vmatpush.msra.mxu0 0.0
    %174 = vmatpush.msra.mxu0 0.0
    %175 = vmatpush.msra.mxu0 0.0
    %176 = vmatpush.msra.mxu0 0.0
    %177 = vmatpush.msra.mxu0 0.0
    %178 = vmatpush.msra.mxu0 0.0
    %179 = vmatpush.msra.mxu0 0.0
    %180 = vmatpush.msra.mxu0 0.0
    %181 = vmatpush.msra.mxu0 %v80
    %182 = vmatpush.msra.mxu0 %v79
    %183 = vmatpush.msra.mxu0 %v78
    %184 = vmatpush.msra.mxu0 %v77
    %185 = vmatpush.msra.mxu0 %v76
    %186 = vmatpush.msra.mxu0 %v75
    %187 = vmatpush.msra.mxu0 %v74
    %188 = vmatpush.msra.mxu0 %v73
    %189 = vmatmul.f32.gmra.mxu0 %v171
    %v190 = vpop.f32.mrf.mxu0
    %v191 = vadd.f32 %v113, %v190
    %192 = vdwg.mxu0
    %193 = vst.msk [vmem:[#allocation4 + $0x8] sm:$0xff] %vm42, %v191
    // Predicated region
    $region30: #{tpu_custom_call.1} parent=1 // pred_check
      _
    $region31: #{tpu_custom_call.1} parent=1 // pred_check_branch
      %195 = sbr.rel (0) target = $region33
    $region32: #{tpu_custom_call.1} parent=1 // pred_region
      %197 = vsyncadd [#allocation5], 0
      %s198 = sshll.u32 [#allocation4], 4
      %s199 = int_to_ptr.vmem [resolvable:$true] %s198
      %s200 = sshll.u32 %s8, 4
      %s201 = int_to_ptr.hbm [resolvable:$true] %s200
      %206 = dma.vmem_to_hbm [thread:$0]  %s199, 256, %s201, [#allocation5], 128, 128, 8
    $region33: #{tpu_custom_call.1} parent=1 // pred_fallthru
      _
    // Predicated region
    $region34: #{tpu_custom_call.1} parent=1 // pred_check
      _
    $region35: #{tpu_custom_call.1} parent=1 // pred_check_branch
      %208 = sbr.rel (0) target = $region37
    $region36: #{tpu_custom_call.1} parent=1 // pred_region
      %210 = dma.done [#allocation5], 256
    $region37: #{tpu_custom_call.1} parent=1 // pred_fallthru
      _
    %211 = vsyncpa [#allocation5], 1

</llo_original>
